<compile_context>
chip_gen: v5e
topology: v5e:2x2
jax: 0.10.0
libtpu: 0.0.40
codegen_flags: <defaults>
</compile_context>

<pallas_src>
import functools

import jax
import jax.numpy as jnp
from jax import lax
from jax.experimental import pallas as pl
from jax.experimental.pallas import tpu as pltpu

_BIG_LABEL = 2 ** 30  # sentinel for masked lanes in the running-min of labels


def _dc_ce_kernel(x_ref, y_ref,
                  tp_ref, fp_ref, fn_ref, ce_ref, lmin_ref, lmax_ref,
                  *, hw, needs_mask):
    t = pl.program_id(1)

    # Per-batch resident accumulators: init on the first pixel tile.
    @pl.when(t == 0)
    def _():
        tp_ref[...] = jnp.zeros_like(tp_ref)
        fp_ref[...] = jnp.zeros_like(fp_ref)
        fn_ref[...] = jnp.zeros_like(fn_ref)
        ce_ref[...] = jnp.zeros_like(ce_ref)
        lmin_ref[...] = jnp.full(lmin_ref.shape, _BIG_LABEL, lmin_ref.dtype)
        lmax_ref[...] = jnp.full(lmax_ref.shape, -1, lmax_ref.dtype)

    x = x_ref[0].astype(jnp.float32)   # (C, T) logits (bf16 inputs cast here)
    lbl = y_ref[0]                     # (1, T) int32 labels
    C, T = x.shape

    if needs_mask:
        lane = lax.broadcasted_iota(jnp.int32, (1, T), 1)
        valid = (t * T + lane) < hw                      # (1, T) bool
        valid_f = valid.astype(jnp.float32)
        x = jnp.where(valid, x, 0.0)                     # sanitize padded lanes
        lbl = jnp.where(valid, lbl, -1)                  # -> zero one-hot rows

    # Numerically stable softmax over the class (sublane) axis.
    m = jnp.max(x, axis=0, keepdims=True)                # (1, T)
    e = jnp.exp(x - m)                                   # (C, T)
    s = jnp.sum(e, axis=0, keepdims=True)                # (1, T)
    inv = pl.reciprocal(s, approx=True)                  # EUP slot (~free)
    if needs_mask:
        inv = inv * valid_f                              # padded pixels -> p=0
    p = e * inv                                          # (C, T)

    # One-hot from labels: (C, 1) class iota vs (1, T) labels.
    cls = lax.broadcasted_iota(jnp.int32, (C, 1), 0)
    onehot = (cls == lbl).astype(jnp.float32)            # (C, T)

    # tp / fp / fn partial sums over this pixel tile (lane reductions).
    tp = jnp.sum(p * onehot, axis=1, keepdims=True)      # (C, 1)
    fp = jnp.sum(p, axis=1, keepdims=True) - tp          # == sum(p*(1-oh))
    fn = jnp.sum(onehot, axis=1, keepdims=True) - tp     # == sum((1-p)*oh)

    # Cross entropy with logits: sum_pixels (logsumexp(x) - x[label]).
    lse = m + jnp.log(s)                                 # (1, T)
    xlab = jnp.sum(x * onehot, axis=0, keepdims=True)    # (1, T)
    ce_terms = lse - xlab
    if needs_mask:
        ce_terms = ce_terms * valid_f
    ce_tile = jnp.sum(ce_terms, axis=1, keepdims=True)   # (1, 1)

    tp_ref[...] += tp.reshape(tp_ref.shape)
    fp_ref[...] += fp.reshape(fp_ref.shape)
    fn_ref[...] += fn.reshape(fn_ref.shape)
    ce_ref[...] += ce_tile.reshape(ce_ref.shape)

    # Running label min / max (for the "single unique label" early-out).
    if needs_mask:
        lmin_src = jnp.where(valid, lbl, _BIG_LABEL)
    else:
        lmin_src = lbl
    lmin_t = jnp.min(lmin_src, axis=1, keepdims=True)    # (1, 1)
    lmax_t = jnp.max(lbl, axis=1, keepdims=True)         # padded lanes are -1
    lmin_ref[...] = jnp.minimum(lmin_ref[...], lmin_t.reshape(lmin_ref.shape))
    lmax_ref[...] = jnp.maximum(lmax_ref[...], lmax_t.reshape(lmax_ref.shape))


def _pick_tile(hw, c, max_tile=8192, vmem_budget_bytes=8 * 1024 * 1024):
    """Largest pixel tile (multiple of 128, capped by a VMEM budget)."""
    # Double-buffered f32 logits (C*tile*4*2) + int32 labels (tile*4*2).
    bytes_per_pixel = (c * 4 + 4) * 2
    cap = max(128, (vmem_budget_bytes // bytes_per_pixel) // 128 * 128)
    tile = min(max_tile, cap)
    if hw <= tile:
        return hw            # single full-extent tile (always layout-legal)
    return tile              # multiple of 128; last tile masked if needed


def dc_and_ce_loss(net_output, target, *, weight_ce=1.0, weight_dice=1.0,
                   smooth=1.0, max_tile=8192):
    """JAX/Pallas equivalent of DC_and_CE_loss(soft_dice_kwargs={}, ce_kwargs={}).

    net_output: (B, C, H, W) float logits (NCHW, no nonlinearity applied);
                f32 or bf16 (cast to f32 inside the kernel).
    target:     (B, 1, H, W) integer label map with values in [0, C).
    """
    B, C, H, W = net_output.shape
    HW = H * W

    x3 = net_output.reshape(B, C, HW)                    # keep native dtype
    y3 = target.reshape(B, 1, HW).astype(jnp.int32)

    tile = _pick_tile(HW, C, max_tile=max_tile)
    num_tiles = pl.cdiv(HW, tile)
    needs_mask = (HW % tile) != 0

    kernel = functools.partial(_dc_ce_kernel, hw=HW, needs_mask=needs_mask)

    tp_o, fp_o, fn_o, ce_o, lmin_o, lmax_o = pl.pallas_call(
        kernel,
        out_shape=(
            jax.ShapeDtypeStruct((B, C, 1), jnp.float32),   # tp
            jax.ShapeDtypeStruct((B, C, 1), jnp.float32),   # fp
            jax.ShapeDtypeStruct((B, C, 1), jnp.float32),   # fn
            jax.ShapeDtypeStruct((B, 1, 1), jnp.float32),   # per-batch CE sum
            jax.ShapeDtypeStruct((B, 1, 1), jnp.int32),     # per-batch min lbl
            jax.ShapeDtypeStruct((B, 1, 1), jnp.int32),     # per-batch max lbl
        ),
        grid_spec=pltpu.PrefetchScalarGridSpec(
            num_scalar_prefetch=0,
            grid=(B, num_tiles),
            in_specs=[
                pl.BlockSpec((1, C, tile), lambda b, t: (b, 0, t)),
                pl.BlockSpec((1, 1, tile), lambda b, t: (b, 0, t)),
            ],
            out_specs=[
                pl.BlockSpec((1, C, 1), lambda b, t: (b, 0, 0)),
                pl.BlockSpec((1, C, 1), lambda b, t: (b, 0, 0)),
                pl.BlockSpec((1, C, 1), lambda b, t: (b, 0, 0)),
                pl.BlockSpec((1, 1, 1), lambda b, t: (b, 0, 0)),
                pl.BlockSpec((1, 1, 1), lambda b, t: (b, 0, 0)),
                pl.BlockSpec((1, 1, 1), lambda b, t: (b, 0, 0)),
            ],
        ),
        compiler_params=pltpu.CompilerParams(
            dimension_semantics=("parallel", "arbitrary")),
    )(x3, y3)

    tp = tp_o[:, :, 0]   # (B, C)
    fp = fp_o[:, :, 0]
    fn = fn_o[:, :, 0]

    # SoftDiceLoss (batch_dice=False, do_bg=True, smooth=1.0)
    nominator = 2.0 * tp + smooth
    denominator = 2.0 * tp + fp + fn + smooth
    dc = nominator / (denominator + 1e-8)
    dc_loss = 1.0 - jnp.mean(dc)

    # CrossentropyND: mean over all B*H*W pixels (sum of per-batch sums).
    ce_loss = jnp.sum(ce_o) / jnp.float32(B * HW)

    loss = weight_ce * ce_loss + weight_dice * dc_loss

    # Torch forward returns 0.0 when the target contains a single unique label.
    # TODO(synk): the torch module also print()s 'label wrong!!!' here; no
    # side-effecting print is emitted from the kernel.
    single_label = jnp.min(lmin_o) == jnp.max(lmax_o)
    return jnp.where(single_label, jnp.asarray(0.0, loss.dtype), loss)


def _reference_loss(net_output, target, weight_ce=1.0, weight_dice=1.0,
                    smooth=1.0):
    """Pure-JAX reference mirroring the PyTorch forward (for verification)."""
    B, C, H, W = net_output.shape
    logits = net_output.reshape(B, C, -1).astype(jnp.float32)
    lbl = target.reshape(B, -1).astype(jnp.int32)
    p = jax.nn.softmax(logits, axis=1)
    onehot = jax.nn.one_hot(lbl, C, axis=1, dtype=jnp.float32)   # (B, C, HW)
    tp = jnp.sum(p * onehot, axis=2)
    fp = jnp.sum(p * (1.0 - onehot), axis=2)
    fn = jnp.sum((1.0 - p) * onehot, axis=2)
    dc = (2.0 * tp + smooth) / (2.0 * tp + fp + fn + smooth + 1e-8)
    dc_loss = 1.0 - jnp.mean(dc)
    logp = jax.nn.log_softmax(logits, axis=1)
    ce_loss = -jnp.mean(jnp.sum(logp * onehot, axis=1))
    loss = weight_ce * ce_loss + weight_dice * dc_loss
    single_label = jnp.min(lbl) == jnp.max(lbl)
    return jnp.where(single_label, jnp.asarray(0.0, loss.dtype), loss)


if __name__ == "__main__":
    key = jax.random.PRNGKey(0)
    k1, k2, k3, k4 = jax.random.split(key, 4)

    # 1) Main small test (single full-extent pixel tile).
    B, C, H, W = 2, 4, 16, 16
    net_output = jax.random.normal(k1, (B, C, H, W), dtype=jnp.float32)
    target = jax.random.randint(k2, (B, 1, H, W), 0, C, dtype=jnp.int32)

    loss = dc_and_ce_loss(net_output, target)
    jax.block_until_ready(loss)
    ref = _reference_loss(net_output, target)
    # approx reciprocal in the softmax -> slightly looser tolerance
    assert jnp.allclose(loss, ref, rtol=2e-3, atol=1e-4), (loss, ref)

    # 2) Masked-remainder path: H*W=576 with a forced small tile (256) so the
    #    last pixel tile is partial and must be masked.
    B2, C2, H2, W2 = 2, 4, 24, 24
    x2 = jax.random.normal(k3, (B2, C2, H2, W2), dtype=jnp.float32)
    y2 = jax.random.randint(k4, (B2, 1, H2, W2), 0, C2, dtype=jnp.int32)
    loss2 = dc_and_ce_loss(x2, y2, max_tile=256)
    jax.block_until_ready(loss2)
    ref2 = _reference_loss(x2, y2)
    assert jnp.allclose(loss2, ref2, rtol=2e-3, atol=1e-4), (loss2, ref2)

    # 3) bf16 logits path (kernel casts to f32 internally).
    loss3 = dc_and_ce_loss(net_output.astype(jnp.bfloat16), target)
    jax.block_until_ready(loss3)
    assert jnp.allclose(loss3, ref, rtol=2e-2, atol=1e-2), (loss3, ref)

    print("KERNEL_OK")
</pallas_src>

<mosaic_0001>
module attributes {stable_mosaic.version = 11 : i64} {
  func.func @_dc_ce_kernel(%arg0: i32, %arg1: i32, %arg2: memref<1x4x256xf32, #tpu.memory_space<vmem>>, %arg3: memref<1x1x256xi32, #tpu.memory_space<vmem>>, %arg4: memref<1x4x1xf32, #tpu.memory_space<vmem>>, %arg5: memref<1x4x1xf32, #tpu.memory_space<vmem>>, %arg6: memref<1x4x1xf32, #tpu.memory_space<vmem>>, %arg7: memref<1x1x1xf32, #tpu.memory_space<vmem>>, %arg8: memref<1x1x1xi32, #tpu.memory_space<vmem>>, %arg9: memref<1x1x1xi32, #tpu.memory_space<vmem>>) attributes {dimension_semantics = [#tpu.dimension_semantics<parallel>, #tpu.dimension_semantics<arbitrary>], iteration_bounds = array<i64: 2, 1>, scalar_prefetch = 0 : i64, scratch_operands = 0 : i64, tpu.core_type = #tpu.core_type<tc>, window_params = [{transform_indices = @transform_0, window_bounds = array<i64: 1, 4, 256>}, {transform_indices = @transform_1, window_bounds = array<i64: 1, 1, 256>}, {transform_indices = @transform_2, window_bounds = array<i64: 1, 4, 1>}, {transform_indices = @transform_3, window_bounds = array<i64: 1, 4, 1>}, {transform_indices = @transform_4, window_bounds = array<i64: 1, 4, 1>}, {transform_indices = @transform_5, window_bounds = array<i64: 1, 1, 1>}, {transform_indices = @transform_6, window_bounds = array<i64: 1, 1, 1>}, {transform_indices = @transform_7, window_bounds = array<i64: 1, 1, 1>}]} {
    %c0_i32 = arith.constant 0 : i32
    %0 = arith.cmpi eq, %arg1, %c0_i32 : i32
    %1 = arith.extui %0 : i1 to i32
    %c0_i32_0 = arith.constant 0 : i32
    %2 = arith.cmpi ne, %1, %c0_i32_0 : i32
    scf.if %2 {
      %cst_50 = arith.constant 0.000000e+00 : f32
      %68 = vector.broadcast %cst_50 : f32 to vector<1x4x1xf32>
      %c0_51 = arith.constant 0 : index
      %c0_52 = arith.constant 0 : index
      %c0_53 = arith.constant 0 : index
      %69 = vector.load %arg4[%c0_51, %c0_52, %c0_53] : memref<1x4x1xf32, #tpu.memory_space<vmem>>, vector<1x4x1xf32>
      tpu.vector_store %arg4[%c0_51, %c0_52, %c0_53], %68 {strides = array<i32>} : memref<1x4x1xf32, #tpu.memory_space<vmem>>, vector<1x4x1xf32>,
      %cst_54 = arith.constant 0.000000e+00 : f32
      %70 = vector.broadcast %cst_54 : f32 to vector<1x4x1xf32>
      %c0_55 = arith.constant 0 : index
      %c0_56 = arith.constant 0 : index
      %c0_57 = arith.constant 0 : index
      %71 = vector.load %arg5[%c0_55, %c0_56, %c0_57] : memref<1x4x1xf32, #tpu.memory_space<vmem>>, vector<1x4x1xf32>
      tpu.vector_store %arg5[%c0_55, %c0_56, %c0_57], %70 {strides = array<i32>} : memref<1x4x1xf32, #tpu.memory_space<vmem>>, vector<1x4x1xf32>,
      %cst_58 = arith.constant 0.000000e+00 : f32
      %72 = vector.broadcast %cst_58 : f32 to vector<1x4x1xf32>
      %c0_59 = arith.constant 0 : index
      %c0_60 = arith.constant 0 : index
      %c0_61 = arith.constant 0 : index
      %73 = vector.load %arg6[%c0_59, %c0_60, %c0_61] : memref<1x4x1xf32, #tpu.memory_space<vmem>>, vector<1x4x1xf32>
      tpu.vector_store %arg6[%c0_59, %c0_60, %c0_61], %72 {strides = array<i32>} : memref<1x4x1xf32, #tpu.memory_space<vmem>>, vector<1x4x1xf32>,
      %cst_62 = arith.constant 0.000000e+00 : f32
      %74 = vector.broadcast %cst_62 : f32 to vector<1x1x1xf32>
      %c0_63 = arith.constant 0 : index
      %c0_64 = arith.constant 0 : index
      %c0_65 = arith.constant 0 : index
      %75 = vector.load %arg7[%c0_63, %c0_64, %c0_65] : memref<1x1x1xf32, #tpu.memory_space<vmem>>, vector<1x1x1xf32>
      tpu.vector_store %arg7[%c0_63, %c0_64, %c0_65], %74 {strides = array<i32>} : memref<1x1x1xf32, #tpu.memory_space<vmem>>, vector<1x1x1xf32>,
      %c1073741824_i32 = arith.constant 1073741824 : i32
      %76 = vector.broadcast %c1073741824_i32 : i32 to vector<1x1x1xi32>
      %c0_66 = arith.constant 0 : index
      %c0_67 = arith.constant 0 : index
      %c0_68 = arith.constant 0 : index
      %77 = vector.load %arg8[%c0_66, %c0_67, %c0_68] : memref<1x1x1xi32, #tpu.memory_space<vmem>>, vector<1x1x1xi32>
      tpu.vector_store %arg8[%c0_66, %c0_67, %c0_68], %76 {strides = array<i32>} : memref<1x1x1xi32, #tpu.memory_space<vmem>>, vector<1x1x1xi32>,
      %c-1_i32 = arith.constant -1 : i32
      %78 = vector.broadcast %c-1_i32 : i32 to vector<1x1x1xi32>
      %c0_69 = arith.constant 0 : index
      %c0_70 = arith.constant 0 : index
      %c0_71 = arith.constant 0 : index
      %79 = vector.load %arg9[%c0_69, %c0_70, %c0_71] : memref<1x1x1xi32, #tpu.memory_space<vmem>>, vector<1x1x1xi32>
      tpu.vector_store %arg9[%c0_69, %c0_70, %c0_71], %78 {strides = array<i32>} : memref<1x1x1xi32, #tpu.memory_space<vmem>>, vector<1x1x1xi32>,
    } else {
    }
    %c0 = arith.constant 0 : index
    %c0_1 = arith.constant 0 : index
    %c0_2 = arith.constant 0 : index
    %3 = vector.load %arg2[%c0, %c0_1, %c0_2] : memref<1x4x256xf32, #tpu.memory_space<vmem>>, vector<1x4x256xf32>
    %4 = vector.shape_cast %3 : vector<1x4x256xf32> to vector<4x256xf32>
    %c0_3 = arith.constant 0 : index
    %c0_4 = arith.constant 0 : index
    %c0_5 = arith.constant 0 : index
    %5 = vector.load %arg3[%c0_3, %c0_4, %c0_5] : memref<1x1x256xi32, #tpu.memory_space<vmem>>, vector<1x1x256xi32>
    %6 = vector.shape_cast %5 : vector<1x1x256xi32> to vector<1x256xi32>
    %cst = arith.constant dense<0xFF800000> : vector<256xf32>
    %7 = vector.multi_reduction <maximumf>, %4, %cst [0] : vector<4x256xf32> to vector<256xf32>
    %8 = vector.shape_cast %7 : vector<256xf32> to vector<1x256xf32>
    %9 = vector.broadcast %8 : vector<1x256xf32> to vector<4x256xf32>
    %10 = arith.subf %4, %9 : vector<4x256xf32>
    %11 = math.exp %10 : vector<4x256xf32>
    %cst_6 = arith.constant dense<0.000000e+00> : vector<256xf32>
    %12 = vector.multi_reduction <add>, %11, %cst_6 [0] : vector<4x256xf32> to vector<256xf32>
    %13 = vector.shape_cast %12 : vector<256xf32> to vector<1x256xf32>
    %14 = tpu.reciprocal %13 {approx = true} : vector<1x256xf32> -> vector<1x256xf32>
    %15 = vector.broadcast %14 : vector<1x256xf32> to vector<4x256xf32>
    %16 = arith.mulf %11, %15 : vector<4x256xf32>
    %17 = tpu.iota {dimensions = array<i32: 0>} : vector<4x1xi32>
    %18 = vector.broadcast %17 : vector<4x1xi32> to vector<4x256xi32>
    %19 = vector.broadcast %6 : vector<1x256xi32> to vector<4x256xi32>
    %20 = arith.cmpi eq, %18, %19 : vector<4x256xi32>
    %21 = arith.extui %20 : vector<4x256xi1> to vector<4x256xi32>
    %22 = arith.sitofp %21 : vector<4x256xi32> to vector<4x256xf32>
    %23 = arith.mulf %16, %22 : vector<4x256xf32>
    %cst_7 = arith.constant dense<0.000000e+00> : vector<4xf32>
    %24 = vector.multi_reduction <add>, %23, %cst_7 [1] : vector<4x256xf32> to vector<4xf32>
    %25 = vector.shape_cast %24 : vector<4xf32> to vector<4x1xf32>
    %cst_8 = arith.constant dense<0.000000e+00> : vector<4xf32>
    %26 = vector.multi_reduction <add>, %16, %cst_8 [1] : vector<4x256xf32> to vector<4xf32>
    %27 = vector.shape_cast %26 : vector<4xf32> to vector<4x1xf32>
    %28 = arith.subf %27, %25 : vector<4x1xf32>
    %cst_9 = arith.constant dense<0.000000e+00> : vector<4xf32>
    %29 = vector.multi_reduction <add>, %22, %cst_9 [1] : vector<4x256xf32> to vector<4xf32>
    %30 = vector.shape_cast %29 : vector<4xf32> to vector<4x1xf32>
    %31 = arith.subf %30, %25 : vector<4x1xf32>
    %32 = math.log %13 : vector<1x256xf32>
    %33 = arith.addf %8, %32 : vector<1x256xf32>
    %34 = arith.mulf %4, %22 : vector<4x256xf32>
    %cst_10 = arith.constant dense<0.000000e+00> : vector<256xf32>
    %35 = vector.multi_reduction <add>, %34, %cst_10 [0] : vector<4x256xf32> to vector<256xf32>
    %36 = vector.shape_cast %35 : vector<256xf32> to vector<1x256xf32>
    %37 = arith.subf %33, %36 : vector<1x256xf32>
    %cst_11 = arith.constant dense<0.000000e+00> : vector<1xf32>
    %38 = vector.multi_reduction <add>, %37, %cst_11 [1] : vector<1x256xf32> to vector<1xf32>
    %39 = vector.shape_cast %38 : vector<1xf32> to vector<1x1xf32>
    %c0_12 = arith.constant 0 : index
    %c0_13 = arith.constant 0 : index
    %c0_14 = arith.constant 0 : index
    %40 = vector.load %arg4[%c0_12, %c0_13, %c0_14] : memref<1x4x1xf32, #tpu.memory_space<vmem>>, vector<1x4x1xf32>
    %41 = vector.shape_cast %25 : vector<4x1xf32> to vector<1x4x1xf32>
    %42 = arith.addf %40, %41 : vector<1x4x1xf32>
    %c0_15 = arith.constant 0 : index
    %c0_16 = arith.constant 0 : index
    %c0_17 = arith.constant 0 : index
    %43 = vector.load %arg4[%c0_15, %c0_16, %c0_17] : memref<1x4x1xf32, #tpu.memory_space<vmem>>, vector<1x4x1xf32>
    tpu.vector_store %arg4[%c0_15, %c0_16, %c0_17], %42 {strides = array<i32>} : memref<1x4x1xf32, #tpu.memory_space<vmem>>, vector<1x4x1xf32>,
    %c0_18 = arith.constant 0 : index
    %c0_19 = arith.constant 0 : index
    %c0_20 = arith.constant 0 : index
    %44 = vector.load %arg5[%c0_18, %c0_19, %c0_20] : memref<1x4x1xf32, #tpu.memory_space<vmem>>, vector<1x4x1xf32>
    %45 = vector.shape_cast %28 : vector<4x1xf32> to vector<1x4x1xf32>
    %46 = arith.addf %44, %45 : vector<1x4x1xf32>
    %c0_21 = arith.constant 0 : index
    %c0_22 = arith.constant 0 : index
    %c0_23 = arith.constant 0 : index
    %47 = vector.load %arg5[%c0_21, %c0_22, %c0_23] : memref<1x4x1xf32, #tpu.memory_space<vmem>>, vector<1x4x1xf32>
    tpu.vector_store %arg5[%c0_21, %c0_22, %c0_23], %46 {strides = array<i32>} : memref<1x4x1xf32, #tpu.memory_space<vmem>>, vector<1x4x1xf32>,
    %c0_24 = arith.constant 0 : index
    %c0_25 = arith.constant 0 : index
    %c0_26 = arith.constant 0 : index
    %48 = vector.load %arg6[%c0_24, %c0_25, %c0_26] : memref<1x4x1xf32, #tpu.memory_space<vmem>>, vector<1x4x1xf32>
    %49 = vector.shape_cast %31 : vector<4x1xf32> to vector<1x4x1xf32>
    %50 = arith.addf %48, %49 : vector<1x4x1xf32>
    %c0_27 = arith.constant 0 : index
    %c0_28 = arith.constant 0 : index
    %c0_29 = arith.constant 0 : index
    %51 = vector.load %arg6[%c0_27, %c0_28, %c0_29] : memref<1x4x1xf32, #tpu.memory_space<vmem>>, vector<1x4x1xf32>
    tpu.vector_store %arg6[%c0_27, %c0_28, %c0_29], %50 {strides = array<i32>} : memref<1x4x1xf32, #tpu.memory_space<vmem>>, vector<1x4x1xf32>,
    %c0_30 = arith.constant 0 : index
    %c0_31 = arith.constant 0 : index
    %c0_32 = arith.constant 0 : index
    %52 = vector.load %arg7[%c0_30, %c0_31, %c0_32] : memref<1x1x1xf32, #tpu.memory_space<vmem>>, vector<1x1x1xf32>
    %53 = vector.shape_cast %39 : vector<1x1xf32> to vector<1x1x1xf32>
    %54 = arith.addf %52, %53 : vector<1x1x1xf32>
    %c0_33 = arith.constant 0 : index
    %c0_34 = arith.constant 0 : index
    %c0_35 = arith.constant 0 : index
    %55 = vector.load %arg7[%c0_33, %c0_34, %c0_35] : memref<1x1x1xf32, #tpu.memory_space<vmem>>, vector<1x1x1xf32>
    tpu.vector_store %arg7[%c0_33, %c0_34, %c0_35], %54 {strides = array<i32>} : memref<1x1x1xf32, #tpu.memory_space<vmem>>, vector<1x1x1xf32>,
    %cst_36 = arith.constant dense<2147483647> : vector<1xi32>
    %56 = vector.multi_reduction <minsi>, %6, %cst_36 [1] : vector<1x256xi32> to vector<1xi32>
    %57 = vector.shape_cast %56 : vector<1xi32> to vector<1x1xi32>
    %cst_37 = arith.constant dense<-2147483648> : vector<1xi32>
    %58 = vector.multi_reduction <maxsi>, %6, %cst_37 [1] : vector<1x256xi32> to vector<1xi32>
    %59 = vector.shape_cast %58 : vector<1xi32> to vector<1x1xi32>
    %c0_38 = arith.constant 0 : index
    %c0_39 = arith.constant 0 : index
    %c0_40 = arith.constant 0 : index
    %60 = vector.load %arg8[%c0_38, %c0_39, %c0_40] : memref<1x1x1xi32, #tpu.memory_space<vmem>>, vector<1x1x1xi32>
    %61 = vector.shape_cast %57 : vector<1x1xi32> to vector<1x1x1xi32>
    %62 = arith.minsi %60, %61 : vector<1x1x1xi32>
    %c0_41 = arith.constant 0 : index
    %c0_42 = arith.constant 0 : index
    %c0_43 = arith.constant 0 : index
    %63 = vector.load %arg8[%c0_41, %c0_42, %c0_43] : memref<1x1x1xi32, #tpu.memory_space<vmem>>, vector<1x1x1xi32>
    tpu.vector_store %arg8[%c0_41, %c0_42, %c0_43], %62 {strides = array<i32>} : memref<1x1x1xi32, #tpu.memory_space<vmem>>, vector<1x1x1xi32>,
    %c0_44 = arith.constant 0 : index
    %c0_45 = arith.constant 0 : index
    %c0_46 = arith.constant 0 : index
    %64 = vector.load %arg9[%c0_44, %c0_45, %c0_46] : memref<1x1x1xi32, #tpu.memory_space<vmem>>, vector<1x1x1xi32>
    %65 = vector.shape_cast %59 : vector<1x1xi32> to vector<1x1x1xi32>
    %66 = arith.maxsi %64, %65 : vector<1x1x1xi32>
    %c0_47 = arith.constant 0 : index
    %c0_48 = arith.constant 0 : index
    %c0_49 = arith.constant 0 : index
    %67 = vector.load %arg9[%c0_47, %c0_48, %c0_49] : memref<1x1x1xi32, #tpu.memory_space<vmem>>, vector<1x1x1xi32>
    tpu.vector_store %arg9[%c0_47, %c0_48, %c0_49], %66 {strides = array<i32>} : memref<1x1x1xi32, #tpu.memory_space<vmem>>, vector<1x1x1xi32>,
    return
  }
  func.func @transform_0(%arg0: i32, %arg1: i32) -> (i32, i32, i32) {
    %c0_i32 = arith.constant 0 : i32
    %c0_i32_0 = arith.constant 0 : i32
    return %arg0, %c0_i32, %arg1 : i32, i32, i32
  }
  func.func @transform_1(%arg0: i32, %arg1: i32) -> (i32, i32, i32) {
    %c0_i32 = arith.constant 0 : i32
    %c0_i32_0 = arith.constant 0 : i32
    return %arg0, %c0_i32, %arg1 : i32, i32, i32
  }
  func.func @transform_2(%arg0: i32, %arg1: i32) -> (i32, i32, i32) {
    %c0_i32 = arith.constant 0 : i32
    %c0_i32_0 = arith.constant 0 : i32
    %c0_i32_1 = arith.constant 0 : i32
    return %arg0, %c0_i32, %c0_i32_0 : i32, i32, i32
  }
  func.func @transform_3(%arg0: i32, %arg1: i32) -> (i32, i32, i32) {
    %c0_i32 = arith.constant 0 : i32
    %c0_i32_0 = arith.constant 0 : i32
    %c0_i32_1 = arith.constant 0 : i32
    return %arg0, %c0_i32, %c0_i32_0 : i32, i32, i32
  }
  func.func @transform_4(%arg0: i32, %arg1: i32) -> (i32, i32, i32) {
    %c0_i32 = arith.constant 0 : i32
    %c0_i32_0 = arith.constant 0 : i32
    %c0_i32_1 = arith.constant 0 : i32
    return %arg0, %c0_i32, %c0_i32_0 : i32, i32, i32
  }
  func.func @transform_5(%arg0: i32, %arg1: i32) -> (i32, i32, i32) {
    %c0_i32 = arith.constant 0 : i32
    %c0_i32_0 = arith.constant 0 : i32
    %c0_i32_1 = arith.constant 0 : i32
    return %arg0, %c0_i32, %c0_i32_0 : i32, i32, i32
  }
  func.func @transform_6(%arg0: i32, %arg1: i32) -> (i32, i32, i32) {
    %c0_i32 = arith.constant 0 : i32
    %c0_i32_0 = arith.constant 0 : i32
    %c0_i32_1 = arith.constant 0 : i32
    return %arg0, %c0_i32, %c0_i32_0 : i32, i32, i32
  }
  func.func @transform_7(%arg0: i32, %arg1: i32) -> (i32, i32, i32) {
    %c0_i32 = arith.constant 0 : i32
    %c0_i32_0 = arith.constant 0 : i32
    %c0_i32_1 = arith.constant 0 : i32
    return %arg0, %c0_i32, %c0_i32_0 : i32, i32, i32
  }
}

</mosaic_0001>

<llo_original>
// kernel: tpu_custom_call.1
$region0: #{tpu_custom_call.1}
  #allocation0 [shape = 'u32[]', space=smem, size = 0x4, offset = 0x4, fixed_abs, tag = 'smem constant byte address 0x4 - core index']
  #allocation1 [shape = 'u32[72,128]{1,0:T(1,128)}', space=vmem, size = 0x9000, scoped, tag = 'internal scratch']
  %s0 = inlined_call_operand.hbm [shape: f32[2,4,256], index: 0, kind: input, shape index: {}]
  %s1 = inlined_call_operand.hbm [shape: s32[2,1,256], index: 1, kind: input, shape index: {}]
  %s2 = inlined_call_operand.vmem [shape: f32[2,4,1], index: 2, kind: output, shape index: {0}]
  %s3 = inlined_call_operand.vmem [shape: f32[2,4,1], index: 3, kind: output, shape index: {1}]
  %s4 = inlined_call_operand.vmem [shape: f32[2,4,1], index: 4, kind: output, shape index: {2}]
  %s5 = inlined_call_operand.vmem [shape: f32[2,1,1], index: 5, kind: output, shape index: {3}]
  %s6 = inlined_call_operand.vmem [shape: s32[2,1,1], index: 6, kind: output, shape index: {4}]
  %s7 = inlined_call_operand.vmem [shape: s32[2,1,1], index: 7, kind: output, shape index: {5}]
  %8 = xla_tuple %s2, %s3, %s4, %s5, %s6, %s7
  %s9 = sld [smem:[#allocation0]]
  $region93: #{tpu_custom_call.1} parent=0
    _
  %s11 = ssub.s32 1, %s9
  %s12 = scalar_select 0, %s11, %s9
  $region1: #{tpu_custom_call.1} parent=0
    #allocation2 [shape = 'u8[8192]{0}', space=vmem, size = 0x2000, scoped, tag = 'input window, operand 0']
    #allocation3 [shape = 's32[2]{0}', space=sflag, size = 0x8, scoped, tag = 'scoped memory for tpu_custom_call.1']
    #allocation4 [shape = 'u8[2048]{0}', space=vmem, size = 0x800, scoped, tag = 'input window, operand 1']
    #allocation5 [shape = 's32[2]{0}', space=sflag, size = 0x8, scoped, tag = 'scoped memory for tpu_custom_call.1']
    %13 = vsyncpa [#allocation3], 0
    %s14 = scalar_lea.sflag [#allocation3], 1
    %15 = vsyncpa %s14, 0
    %16 = vsyncpa [#allocation5], 0
    %s17 = scalar_lea.sflag [#allocation5], 1
    %18 = vsyncpa %s17, 0
    loop: start=0, step=1, limit=4
    $region2: #{tpu_custom_call.1} parent=1 // loop_pre_header
      _
    $region3: #{tpu_custom_call.1} parent=1 // loop_header
      %s20 = sphi 0, %s24
      %p21 = scmp.ge.s32.totalorder %s20, 4
      %s27 = sphi 0, %s39
      %s28 = sphi 0, %s35
      %s29 = sphi 0, %s27
      %s30 = sphi 0, %s28
      %s31 = sphi 0, %s29
      %s32 = sphi 0, %s30
      %s44 = sphi 0, %s46
      %s47 = sphi 0, %s44
      %s48 = sphi 0, %s47
      %s64 = sphi 0, %s48
      %s72 = sphi 0, %s74
      %s75 = sphi 0, %s72
      %s76 = sphi 0, %s75
      %s92 = sphi 0, %s76
      %s98 = sphi 0, %s100
      %s101 = sphi 0, %s98
      %s102 = sphi 0, %s101
      %s118 = sphi 0, %s102
      %s124 = sphi 0, %s126
      %s127 = sphi 0, %s124
      %s128 = sphi 0, %s127
      %s144 = sphi 0, %s128
      %s150 = sphi 0, %s152
      %s153 = sphi 0, %s150
      %s154 = sphi 0, %s153
      %s170 = sphi 0, %s154
      %s176 = sphi 0, %s178
      %s179 = sphi 0, %s176
      %s180 = sphi 0, %s179
      %s196 = sphi 0, %s180
      %s202 = sphi 0, %s204
      %s205 = sphi 0, %s202
      %s206 = sphi 0, %s205
      %s222 = sphi 0, %s206
      %s228 = sphi 0, %s230
      %s231 = sphi 0, %s228
      %s232 = sphi 0, %s231
      %s248 = sphi 0, %s232
    $region4: #{tpu_custom_call.1} parent=1 // loop_header_branch
      %23 = sbr.rel (%p21) target = $region8
    $region5: #{tpu_custom_call.1} parent=1 // loop_body
      %s25 = ssub.s32 %s20, 1
      %s26 = ssub.s32 %s20, 2
      %s33 = sadd.s32 1, %s28
      %p34 = scmp.ge.s32.totalorder %s33, 1
      %s35 = scalar_select %p34, 0, %s33
      %s36 = sadd.s32 1, %s27
      %s37 = scalar_select %p34, %s36, %s27
      %p38 = scmp.ge.s32.totalorder %s37, 2
      %s39 = scalar_select %p38, 0, %s37
      %s40 = ssub.s32 %s27, %s39
      %s41 = ssub.s32 %s28, %s35
      %s42 = sor.u32 %s40, %s41
      %p43 = scmp.eq.s32.totalorder %s42, 0
      %s45 = sadd.s32 %s44, 1
      %s46 = scalar_select %p43, %s44, %s45
      %p49 = pneg %p43
      %p50 = scmp.eq.s32.totalorder %s20, 1
      %p51 = por %p49, %p50
      %p52 = scmp.ne.s32.totalorder %s44, %s47
      %p53 = scmp.eq.s32.totalorder %s20, 0
      %p54 = por %p52, %p53
      %p55 = scmp.ne.s32.totalorder %s44, %s47
      %p56 = scmp.eq.s32.totalorder %s25, 1
      %p57 = por %p55, %p56
      %p58 = scmp.ne.s32.totalorder %s47, %s48
      %p59 = scmp.eq.s32.totalorder %s25, 0
      %p60 = por %p58, %p59
      %p61 = scmp.ne.s32.totalorder %s47, %s48
      %p62 = scmp.eq.s32.totalorder %s26, 1
      %p63 = por %p61, %p62
      %p65 = scmp.ne.s32.totalorder %s48, %s64
      %p66 = scmp.eq.s32.totalorder %s26, 0
      %p67 = por %p65, %p66
      %s68 = ssub.s32 %s27, %s39
      %s69 = ssub.s32 %s28, %s35
      %s70 = sor.u32 %s68, %s69
      %p71 = scmp.eq.s32.totalorder %s70, 0
      %s73 = sadd.s32 %s72, 1
      %s74 = scalar_select %p71, %s72, %s73
      %p77 = pneg %p71
      %p78 = scmp.eq.s32.totalorder %s20, 1
      %p79 = por %p77, %p78
      %p80 = scmp.ne.s32.totalorder %s72, %s75
      %p81 = scmp.eq.s32.totalorder %s20, 0
      %p82 = por %p80, %p81
      %p83 = scmp.ne.s32.totalorder %s72, %s75
      %p84 = scmp.eq.s32.totalorder %s25, 1
      %p85 = por %p83, %p84
      %p86 = scmp.ne.s32.totalorder %s75, %s76
      %p87 = scmp.eq.s32.totalorder %s25, 0
      %p88 = por %p86, %p87
      %p89 = scmp.ne.s32.totalorder %s75, %s76
      %p90 = scmp.eq.s32.totalorder %s26, 1
      %p91 = por %p89, %p90
      %p93 = scmp.ne.s32.totalorder %s76, %s92
      %p94 = scmp.eq.s32.totalorder %s26, 0
      %p95 = por %p93, %p94
      %s96 = ssub.s32 %s27, %s39
      %p97 = scmp.eq.s32.totalorder %s96, 0
      %s99 = sadd.s32 %s98, 1
      %s100 = scalar_select %p97, %s98, %s99
      %p103 = pneg %p97
      %p104 = scmp.eq.s32.totalorder %s20, 1
      %p105 = por %p103, %p104
      %p106 = scmp.ne.s32.totalorder %s98, %s101
      %p107 = scmp.eq.s32.totalorder %s20, 0
      %p108 = por %p106, %p107
      %p109 = scmp.ne.s32.totalorder %s98, %s101
      %p110 = scmp.eq.s32.totalorder %s25, 1
      %p111 = por %p109, %p110
      %p112 = scmp.ne.s32.totalorder %s101, %s102
      %p113 = scmp.eq.s32.totalorder %s25, 0
      %p114 = por %p112, %p113
      %p115 = scmp.ne.s32.totalorder %s101, %s102
      %p116 = scmp.eq.s32.totalorder %s26, 1
      %p117 = por %p115, %p116
      %p119 = scmp.ne.s32.totalorder %s102, %s118
      %p120 = scmp.eq.s32.totalorder %s26, 0
      %p121 = por %p119, %p120
      %s122 = ssub.s32 %s27, %s39
      %p123 = scmp.eq.s32.totalorder %s122, 0
      %s125 = sadd.s32 %s124, 1
      %s126 = scalar_select %p123, %s124, %s125
      %p129 = pneg %p123
      %p130 = scmp.eq.s32.totalorder %s20, 1
      %p131 = por %p129, %p130
      %p132 = scmp.ne.s32.totalorder %s124, %s127
      %p133 = scmp.eq.s32.totalorder %s20, 0
      %p134 = por %p132, %p133
      %p135 = scmp.ne.s32.totalorder %s124, %s127
      %p136 = scmp.eq.s32.totalorder %s25, 1
      %p137 = por %p135, %p136
      %p138 = scmp.ne.s32.totalorder %s127, %s128
      %p139 = scmp.eq.s32.totalorder %s25, 0
      %p140 = por %p138, %p139
      %p141 = scmp.ne.s32.totalorder %s127, %s128
      %p142 = scmp.eq.s32.totalorder %s26, 1
      %p143 = por %p141, %p142
      %p145 = scmp.ne.s32.totalorder %s128, %s144
      %p146 = scmp.eq.s32.totalorder %s26, 0
      %p147 = por %p145, %p146
      %s148 = ssub.s32 %s27, %s39
      %p149 = scmp.eq.s32.totalorder %s148, 0
      %s151 = sadd.s32 %s150, 1
      %s152 = scalar_select %p149, %s150, %s151
      %p155 = pneg %p149
      %p156 = scmp.eq.s32.totalorder %s20, 1
      %p157 = por %p155, %p156
      %p158 = scmp.ne.s32.totalorder %s150, %s153
      %p159 = scmp.eq.s32.totalorder %s20, 0
      %p160 = por %p158, %p159
      %p161 = scmp.ne.s32.totalorder %s150, %s153
      %p162 = scmp.eq.s32.totalorder %s25, 1
      %p163 = por %p161, %p162
      %p164 = scmp.ne.s32.totalorder %s153, %s154
      %p165 = scmp.eq.s32.totalorder %s25, 0
      %p166 = por %p164, %p165
      %p167 = scmp.ne.s32.totalorder %s153, %s154
      %p168 = scmp.eq.s32.totalorder %s26, 1
      %p169 = por %p167, %p168
      %p171 = scmp.ne.s32.totalorder %s154, %s170
      %p172 = scmp.eq.s32.totalorder %s26, 0
      %p173 = por %p171, %p172
      %s174 = ssub.s32 %s27, %s39
      %p175 = scmp.eq.s32.totalorder %s174, 0
      %s177 = sadd.s32 %s176, 1
      %s178 = scalar_select %p175, %s176, %s177
      %p181 = pneg %p175
      %p182 = scmp.eq.s32.totalorder %s20, 1
      %p183 = por %p181, %p182
      %p184 = scmp.ne.s32.totalorder %s176, %s179
      %p185 = scmp.eq.s32.totalorder %s20, 0
      %p186 = por %p184, %p185
      %p187 = scmp.ne.s32.totalorder %s176, %s179
      %p188 = scmp.eq.s32.totalorder %s25, 1
      %p189 = por %p187, %p188
      %p190 = scmp.ne.s32.totalorder %s179, %s180
      %p191 = scmp.eq.s32.totalorder %s25, 0
      %p192 = por %p190, %p191
      %p193 = scmp.ne.s32.totalorder %s179, %s180
      %p194 = scmp.eq.s32.totalorder %s26, 1
      %p195 = por %p193, %p194
      %p197 = scmp.ne.s32.totalorder %s180, %s196
      %p198 = scmp.eq.s32.totalorder %s26, 0
      %p199 = por %p197, %p198
      %s200 = ssub.s32 %s27, %s39
      %p201 = scmp.eq.s32.totalorder %s200, 0
      %s203 = sadd.s32 %s202, 1
      %s204 = scalar_select %p201, %s202, %s203
      %p207 = pneg %p201
      %p208 = scmp.eq.s32.totalorder %s20, 1
      %p209 = por %p207, %p208
      %p210 = scmp.ne.s32.totalorder %s202, %s205
      %p211 = scmp.eq.s32.totalorder %s20, 0
      %p212 = por %p210, %p211
      %p213 = scmp.ne.s32.totalorder %s202, %s205
      %p214 = scmp.eq.s32.totalorder %s25, 1
      %p215 = por %p213, %p214
      %p216 = scmp.ne.s32.totalorder %s205, %s206
      %p217 = scmp.eq.s32.totalorder %s25, 0
      %p218 = por %p216, %p217
      %p219 = scmp.ne.s32.totalorder %s205, %s206
      %p220 = scmp.eq.s32.totalorder %s26, 1
      %p221 = por %p219, %p220
      %p223 = scmp.ne.s32.totalorder %s206, %s222
      %p224 = scmp.eq.s32.totalorder %s26, 0
      %p225 = por %p223, %p224
      %s226 = ssub.s32 %s27, %s39
      %p227 = scmp.eq.s32.totalorder %s226, 0
      %s229 = sadd.s32 %s228, 1
      %s230 = scalar_select %p227, %s228, %s229
      %p233 = pneg %p227
      %p234 = scmp.eq.s32.totalorder %s20, 1
      %p235 = por %p233, %p234
      %p236 = scmp.ne.s32.totalorder %s228, %s231
      %p237 = scmp.eq.s32.totalorder %s20, 0
      %p238 = por %p236, %p237
      %p239 = scmp.ne.s32.totalorder %s228, %s231
      %p240 = scmp.eq.s32.totalorder %s25, 1
      %p241 = por %p239, %p240
      %p242 = scmp.ne.s32.totalorder %s231, %s232
      %p243 = scmp.eq.s32.totalorder %s25, 0
      %p244 = por %p242, %p243
      %p245 = scmp.ne.s32.totalorder %s231, %s232
      %p246 = scmp.eq.s32.totalorder %s26, 1
      %p247 = por %p245, %p246
      %p249 = scmp.ne.s32.totalorder %s232, %s248
      %p250 = scmp.eq.s32.totalorder %s26, 0
      %p251 = por %p249, %p250
      %p252 = scmp.le.s32.totalorder 1, %s20
      %p253 = scmp.lt.s32.totalorder %s20, 3
      %p254 = pnand %p252, %p253
      %p255 = pneg %p254
      // Predicated region
      $region9: #{tpu_custom_call.1} parent=5 // pred_check
        _
      $region10: #{tpu_custom_call.1} parent=5 // pred_check_branch
        %257 = sbr.rel (%p254) target = $region12
      $region11: #{tpu_custom_call.1} parent=5 // pred_region
        %s258 = ssub.s32 %s20, 1
      $region12: #{tpu_custom_call.1} parent=5 // pred_fallthru
        _
      %p259 = scmp.lt.s32.totalorder %s20, 2
      // Predicated region
      $region13: #{tpu_custom_call.1} parent=5 // pred_check
        %p260 = pneg %p259
      $region14: #{tpu_custom_call.1} parent=5 // pred_check_branch
        %262 = sbr.rel (%p260) target = $region16
      $region15: #{tpu_custom_call.1} parent=5 // pred_region
        // Predicated region
        $region17: #{tpu_custom_call.1} parent=15 // pred_check
          %p263 = pneg %p54
        $region18: #{tpu_custom_call.1} parent=15 // pred_check_branch
          %265 = sbr.rel (%p263) target = $region20
        $region19: #{tpu_custom_call.1} parent=15 // pred_region
          %s266 = sand.u32 %s44, 1
          %s267 = scalar_lea.sflag [#allocation3], %s266
          %s268 = sand.u32 %s44, 1
          %s269 = smul.addr %s268, 8
          %s270 = scalar_lea.vmem [#allocation2], %s269
          %s271 = smul.u32 2, %s28
          %273 = vsyncadd %s267, 0
          %s274 = smul.addr %s27, 2
          %s275 = sadd.s32 %s271, %s274
          %s276 = smul.addr %s275, 4
          %s277 = scalar_lea.hbm %s0, %s276
          %s279 = sshll.u32 %s277, 4
          %s280 = int_to_ptr.hbm [resolvable:$true] %s279
          %s281 = sshll.u32 %s270, 4
          %s282 = int_to_ptr.vmem [resolvable:$true] %s281
          %284 = dma.hbm_to_vmem [thread:$0]  %s280, 128, %s282, %s267
        $region20: #{tpu_custom_call.1} parent=15 // pred_fallthru
          _
        // Predicated region
        $region21: #{tpu_custom_call.1} parent=15 // pred_check
          %p285 = pneg %p82
        $region22: #{tpu_custom_call.1} parent=15 // pred_check_branch
          %287 = sbr.rel (%p285) target = $region24
        $region23: #{tpu_custom_call.1} parent=15 // pred_region
          %s288 = sand.u32 %s72, 1
          %s289 = scalar_lea.sflag [#allocation5], %s288
          %s290 = sand.u32 %s72, 1
          %s291 = smul.addr %s290, 2
          %s292 = scalar_lea.vmem [#allocation4], %s291
          %s293 = smul.u32 2, %s28
          %295 = vsyncadd %s289, 0
          %s296 = smul.addr %s27, 2
          %s297 = sadd.s32 %s293, %s296
          %s298 = scalar_lea.hbm %s1, %s297
          %s300 = sshll.u32 %s298, 4
          %s301 = int_to_ptr.hbm [resolvable:$true] %s300
          %s302 = sshll.u32 %s292, 4
          %s303 = int_to_ptr.vmem [resolvable:$true] %s302
          %305 = dma.hbm_to_vmem [thread:$0]  %s301, 32, %s303, %s289
        $region24: #{tpu_custom_call.1} parent=15 // pred_fallthru
          _
      $region16: #{tpu_custom_call.1} parent=5 // pred_fallthru
        _
      %p306 = scmp.le.s32.totalorder 1, %s20
      %p307 = scmp.lt.s32.totalorder %s20, 3
      %p308 = pnand %p306, %p307
      %p309 = pneg %p308
      // Predicated region
      $region25: #{tpu_custom_call.1} parent=5 // pred_check
        _
      $region26: #{tpu_custom_call.1} parent=5 // pred_check_branch
        %311 = sbr.rel (%p308) target = $region28
      $region27: #{tpu_custom_call.1} parent=5 // pred_region
        %s312 = ssub.s32 %s20, 1
        %s313 = sand.u32 %s47, 1
        %s314 = scalar_lea.sflag [#allocation3], %s313
        %s315 = sand.u32 %s47, 1
        %s316 = smul.addr %s315, 8
        %s317 = scalar_lea.vmem [#allocation2], %s316
        // Predicated region
        $region29: #{tpu_custom_call.1} parent=27 // pred_check
          %p318 = pneg %p60
        $region30: #{tpu_custom_call.1} parent=27 // pred_check_branch
          %320 = sbr.rel (%p318) target = $region32
        $region31: #{tpu_custom_call.1} parent=27 // pred_region
          %322 = dma.done %s314, 128
        $region32: #{tpu_custom_call.1} parent=27 // pred_fallthru
          _
        %s323 = sand.u32 %s75, 1
        %s324 = scalar_lea.sflag [#allocation5], %s323
        %s325 = sand.u32 %s75, 1
        %s326 = smul.addr %s325, 2
        %s327 = scalar_lea.vmem [#allocation4], %s326
        // Predicated region
        $region33: #{tpu_custom_call.1} parent=27 // pred_check
          %p328 = pneg %p88
        $region34: #{tpu_custom_call.1} parent=27 // pred_check_branch
          %330 = sbr.rel (%p328) target = $region36
        $region35: #{tpu_custom_call.1} parent=27 // pred_region
          %332 = dma.done %s324, 32
        $region36: #{tpu_custom_call.1} parent=27 // pred_fallthru
          _
        %s333 = sand.u32 %s47, 1
        %s334 = scalar_lea.sflag [#allocation3], %s333
        %s335 = sand.u32 %s47, 1
        %s336 = smul.addr %s335, 8
        %s337 = scalar_lea.vmem [#allocation2], %s336
        %p338 = pneg %p60
        %p339 = pneg %p57
        %s340 = sand.u32 %s75, 1
        %s341 = scalar_lea.sflag [#allocation5], %s340
        %s342 = sand.u32 %s75, 1
        %s343 = smul.addr %s342, 2
        %s344 = scalar_lea.vmem [#allocation4], %s343
        %p345 = pneg %p88
        %p346 = pneg %p85
        %p347 = pneg %p114
        %p348 = pneg %p111
        %p349 = scmp.lt.s32.totalorder %s29, 1
        %s350 = scalar_select %p349, %s29, 1
        %s351 = smul.addr %s350, 4
        %s352 = scalar_lea.vmem %s2, %s351
        %p353 = pneg %p140
        %p354 = pneg %p137
        %p355 = scmp.lt.s32.totalorder %s29, 1
        %s356 = scalar_select %p355, %s29, 1
        %s357 = smul.addr %s356, 4
        %s358 = scalar_lea.vmem %s3, %s357
        %p359 = pneg %p166
        %p360 = pneg %p163
        %p361 = scmp.lt.s32.totalorder %s29, 1
        %s362 = scalar_select %p361, %s29, 1
        %s363 = smul.addr %s362, 4
        %s364 = scalar_lea.vmem %s4, %s363
        %p365 = pneg %p192
        %p366 = pneg %p189
        %p367 = scmp.lt.s32.totalorder %s29, 1
        %s368 = scalar_select %p367, %s29, 1
        %s369 = scalar_lea.vmem %s5, %s368
        %p370 = pneg %p218
        %p371 = pneg %p215
        %p372 = scmp.lt.s32.totalorder %s29, 1
        %s373 = scalar_select %p372, %s29, 1
        %s374 = scalar_lea.vmem %s6, %s373
        %p375 = pneg %p244
        %p376 = pneg %p241
        %p377 = scmp.lt.s32.totalorder %s29, 1
        %s378 = scalar_select %p377, %s29, 1
        %s379 = scalar_lea.vmem %s7, %s378
        %s380 = smul.u32 2, %s30
        %s381 = smul.u32 2, %s30
        %p382 = scmp.lt.s32.totalorder %s29, 1
        %s383 = scalar_select %p382, %s29, 1
        %s384 = smul.addr %s383, 4
        %s385 = scalar_lea.vmem %s2, %s384
        %p386 = scmp.lt.s32.totalorder %s29, 1
        %s387 = scalar_select %p386, %s29, 1
        %s388 = smul.addr %s387, 4
        %s389 = scalar_lea.vmem %s3, %s388
        %p390 = scmp.lt.s32.totalorder %s29, 1
        %s391 = scalar_select %p390, %s29, 1
        %s392 = smul.addr %s391, 4
        %s393 = scalar_lea.vmem %s4, %s392
        %p394 = scmp.lt.s32.totalorder %s29, 1
        %s395 = scalar_select %p394, %s29, 1
        %s396 = scalar_lea.vmem %s5, %s395
        %p397 = scmp.lt.s32.totalorder %s29, 1
        %s398 = scalar_select %p397, %s29, 1
        %s399 = scalar_lea.vmem %s6, %s398
        %p400 = scmp.lt.s32.totalorder %s29, 1
        %s401 = scalar_select %p400, %s29, 1
        %s402 = scalar_lea.vmem %s7, %s401
        %p403 = scmp.eq.s32.totalorder %s30, 0
        // Predicated region
        $region37: #{tpu_custom_call.1} parent=27 // pred_check
          %p404 = pneg %p403
        $region38: #{tpu_custom_call.1} parent=27 // pred_check_branch
          %406 = sbr.rel (%p404) target = $region40
        $region39: #{tpu_custom_call.1} parent=27 // pred_region
          %vm407 = vcmask 3072
          %408 = vst.msk [vmem:[%s385] sm:$0xf] %vm407, 0.0
          %409 = vst.msk [vmem:[%s389] sm:$0xf] %vm407, 0.0
          %410 = vst.msk [vmem:[%s393] sm:$0xf] %vm407, 0.0
          %vm411 = vcmask 0
          %412 = vst.msk [vmem:[%s396] sm:$0x1] %vm411, 0.0
          %413 = vst.msk [vmem:[%s399] sm:$0x1] %vm411, 1073741824
          %414 = vst.msk [vmem:[%s402] sm:$0x1] %vm411, 4294967295
        $region40: #{tpu_custom_call.1} parent=27 // pred_fallthru
          _
        %v415 = vld [vmem:[%s317] sm:$0xff]
        %v416 = vld [vmem:[%s327] sm:$0x3]
        %418 = vst [vmem:[#allocation1] ss:$2 sm:$0xff] %v415
        %v419 = vld.sshfl [vmem:[#allocation1] sm:$0xff pattern:$0x75316420]
        %v420 = vld.sshfl [vmem:[#allocation1 + $0x8] sm:$0xff pattern:$0x75316420]
        %vm423 = vcmask 1043456
        %v424 = vsel %vm423, %v419, -inf
        %v425 = vrot.slane %v424, 4
        %v426 = vmax.f32 %v424, %v425
        %v427 = vrot.slane %v426, 2
        %v428 = vmax.f32 %v426, %v427
        %v429 = vrot.slane %v428, 1
        %v430 = vmax.f32 %v428, %v429
        %v431 = vsel %vm423, %v420, -inf
        %v432 = vrot.slane %v431, 4
        %v433 = vmax.f32 %v431, %v432
        %v434 = vrot.slane %v433, 2
        %v435 = vmax.f32 %v433, %v434
        %v436 = vrot.slane %v435, 1
        %v437 = vmax.f32 %v435, %v436
        %v440 = vrot.slane %v437, 4
        %v441 = vsel %vm423, %v430, %v440
        %v443 = vsub.f32 %v415, %v441
        %v444 = vmul.f32 %v443, 1.442695
        %v445 = vpow.pop %v444
        %447 = vst [vmem:[#allocation1] ss:$2 sm:$0xff] %v445
        %v448 = vld.sshfl [vmem:[#allocation1] sm:$0xff pattern:$0x75316420]
        %v449 = vld.sshfl [vmem:[#allocation1 + $0x8] sm:$0xff pattern:$0x75316420]
        %v452 = vsel %vm423, %v448, 0.0
        %v453 = vrot.slane %v452, 4
        %v454 = vadd.f32 %v452, %v453
        %v455 = vrot.slane %v454, 2
        %v456 = vadd.f32 %v454, %v455
        %v457 = vrot.slane %v456, 1
        %v458 = vadd.f32 %v456, %v457
        %v459 = vsel %vm423, %v449, 0.0
        %v460 = vrot.slane %v459, 4
        %v461 = vadd.f32 %v459, %v460
        %v462 = vrot.slane %v461, 2
        %v463 = vadd.f32 %v461, %v462
        %v464 = vrot.slane %v463, 1
        %v465 = vadd.f32 %v463, %v464
        %v466 = vrcp.pop %v458
        %v467 = vrcp.pop %v465
        %v470 = vrot.slane %v467, 4
        %v471 = vsel %vm423, %v466, %v470
        %v473 = vmul.f32 %v445, %v471
        %v474 = vlaneseq
        %v475 = vshrl.u32 %v474, 7
        %v476 = vperm.slane %v416, 0
        %v477 = vperm.slane %v416, 1
        %vm478 = vcmp.eq.s32.totalorder %v475, %v476
        %vm479 = vcmp.eq.s32.totalorder %v475, %v477
        %v480 = vsel %vm478, 1, 0
        %v481 = vsel %vm479, 1, 0
        %v482 = vcvt.s32.f32 %v480
        %v483 = vcvt.s32.f32 %v481
        %v486 = vrot.slane %v483, 4
        %v487 = vsel %vm423, %v482, %v486
        %v489 = vmul.f32 %v473, %v487
        %491 = vst [vmem:[#allocation1] ss:$2 sm:$0xff] %v489
        %v492 = vld.sshfl [vmem:[#allocation1] sm:$0xff pattern:$0x75316420]
        %v493 = vld.sshfl [vmem:[#allocation1 + $0x8] sm:$0xff pattern:$0x75316420]
        %v496 = vsel %vm423, %v492, 0.0
        %v497 = vsel %vm423, %v493, 0.0
        %v498 = vadd.f32 %v496, %v497
        %499 = vadd.xlane.f32.xlu0 %v498
        %v500 = vpop.xlane.xlu0 %499
        %502 = vst [vmem:[#allocation1] ss:$2 sm:$0xff] %v473
        %v503 = vld.sshfl [vmem:[#allocation1] sm:$0xff pattern:$0x75316420]
        %v504 = vld.sshfl [vmem:[#allocation1 + $0x8] sm:$0xff pattern:$0x75316420]
        %v507 = vsel %vm423, %v503, 0.0
        %v508 = vsel %vm423, %v504, 0.0
        %v509 = vadd.f32 %v507, %v508
        %510 = vadd.xlane.f32.xlu0 %v509
        %v511 = vpop.xlane.xlu0 %510
        %v512 = vsub.f32 %v511, %v500
        %v513 = vsel %vm423, %v482, 0.0
        %v514 = vsel %vm423, %v483, 0.0
        %v515 = vadd.f32 %v513, %v514
        %516 = vadd.xlane.f32.xlu0 %v515
        %v517 = vpop.xlane.xlu0 %516
        %v518 = vsub.f32 %v517, %v500
        %v519 = vlog2.pop %v458
        %v520 = vmul.f32 %v519, 0.6931472
        %v521 = vlog2.pop %v465
        %v522 = vmul.f32 %v521, 0.6931472
        %v523 = vadd.f32 %v430, %v520
        %v524 = vadd.f32 %v437, %v522
        %v525 = vmul.f32 %v415, %v487
        %527 = vst [vmem:[#allocation1] ss:$2 sm:$0xff] %v525
        %v528 = vld.sshfl [vmem:[#allocation1] sm:$0xff pattern:$0x75316420]
        %v529 = vld.sshfl [vmem:[#allocation1 + $0x8] sm:$0xff pattern:$0x75316420]
        %v532 = vsel %vm423, %v528, 0.0
        %v533 = vrot.slane %v532, 4
        %v534 = vadd.f32 %v532, %v533
        %v535 = vrot.slane %v534, 2
        %v536 = vadd.f32 %v534, %v535
        %v537 = vrot.slane %v536, 1
        %v538 = vadd.f32 %v536, %v537
        %v539 = vsel %vm423, %v529, 0.0
        %v540 = vrot.slane %v539, 4
        %v541 = vadd.f32 %v539, %v540
        %v542 = vrot.slane %v541, 2
        %v543 = vadd.f32 %v541, %v542
        %v544 = vrot.slane %v543, 1
        %v545 = vadd.f32 %v543, %v544
        %v546 = vsub.f32 %v523, %v538
        %v547 = vsub.f32 %v524, %v545
        %v548 = vadd.f32 %v546, %v547
        %549 = vadd.xlane.f32.xlu0 %v548
        %v550 = vpop.xlane.xlu0 %549
        %v551 = vld [vmem:[%s385] sm:$0xf]
        %v552 = vadd.f32 %v551, %v500
        %vm553 = vcmask 3072
        %554 = vst.msk [vmem:[%s385] sm:$0xf] %vm553, %v552
        %v555 = vld [vmem:[%s389] sm:$0xf]
        %v556 = vadd.f32 %v555, %v512
        %557 = vst.msk [vmem:[%s389] sm:$0xf] %vm553, %v556
        %v558 = vld [vmem:[%s393] sm:$0xf]
        %v559 = vadd.f32 %v558, %v518
        %560 = vst.msk [vmem:[%s393] sm:$0xf] %vm553, %v559
        %v561 = vld [vmem:[%s396] sm:$0x1]
        %v562 = vadd.f32 %v561, %v550
        %vm563 = vcmask 0
        %564 = vst.msk [vmem:[%s396] sm:$0x1] %vm563, %v562
        %vm565 = vcmask 1040384
        %v566 = vsel %vm565, %v476, 2147483647
        %v567 = vsel %vm565, %v477, 2147483647
        %vm568 = vcmp.lt.s32.totalorder %v566, %v567
        %v569 = vsel %vm568, %v566, %v567
        %v570 = vand.u32 %v569, 65535
        %v571 = vshra.s32 %v569, 16
        %v572 = vcvt.s32.f32 %v570
        %v573 = vcvt.s32.f32 %v571
        %574 = vmin.xlane.f32.xlu0 %v573
        %v575 = vpop.xlane.xlu0 %574
        %vm576 = vcmp.eq.f32.partialorder %v573, %v575
        %v577 = vsel %vm576, %v572, inf
        %578 = vmin.xlane.f32.xlu0 %v577
        %v579 = vpop.xlane.xlu0 %578
        %v580 = vcvt.f32.s32 %v579
        %v581 = vcvt.f32.s32 %v575
        %v582 = vshll.u32 %v581, 16
        %v583 = vadd.s32 %v582, %v580
        %v584 = vsel %vm565, %v476, 2147483648
        %v585 = vsel %vm565, %v477, 2147483648
        %vm586 = vcmp.gt.s32.totalorder %v584, %v585
        %v587 = vsel %vm586, %v584, %v585
        %v588 = vand.u32 %v587, 65535
        %v589 = vshra.s32 %v587, 16
        %v590 = vcvt.s32.f32 %v588
        %v591 = vcvt.s32.f32 %v589
        %592 = vmax.xlane.f32.xlu0 %v591
        %v593 = vpop.xlane.xlu0 %592
        %vm594 = vcmp.eq.f32.partialorder %v591, %v593
        %v595 = vsel %vm594, %v590, -inf
        %596 = vmax.xlane.f32.xlu0 %v595
        %v597 = vpop.xlane.xlu0 %596
        %v598 = vcvt.f32.s32 %v597
        %v599 = vcvt.f32.s32 %v593
        %v600 = vshll.u32 %v599, 16
        %v601 = vadd.s32 %v600, %v598
        %v602 = vld [vmem:[%s399] sm:$0x1]
        %vm603 = vcmp.lt.s32.totalorder %v602, %v583
        %v604 = vsel %vm603, %v602, %v583
        %605 = vst.msk [vmem:[%s399] sm:$0x1] %vm563, %v604
        %v606 = vld [vmem:[%s402] sm:$0x1]
        %vm607 = vcmp.gt.s32.totalorder %v606, %v601
        %v608 = vsel %vm607, %v606, %v601
        %609 = vst.msk [vmem:[%s402] sm:$0x1] %vm563, %v608
        %p610 = scmp.lt.s32.totalorder %s29, 1
        %s611 = scalar_select %p610, %s29, 1
        %s612 = smul.addr %s611, 4
        %s613 = scalar_lea.vmem %s2, %s612
        %p614 = scmp.lt.s32.totalorder %s29, 1
        %s615 = scalar_select %p614, %s29, 1
        %s616 = smul.addr %s615, 4
        %s617 = scalar_lea.vmem %s3, %s616
        %p618 = scmp.lt.s32.totalorder %s29, 1
        %s619 = scalar_select %p618, %s29, 1
        %s620 = smul.addr %s619, 4
        %s621 = scalar_lea.vmem %s4, %s620
        %p622 = scmp.lt.s32.totalorder %s29, 1
        %s623 = scalar_select %p622, %s29, 1
        %s624 = scalar_lea.vmem %s5, %s623
        %p625 = scmp.lt.s32.totalorder %s29, 1
        %s626 = scalar_select %p625, %s29, 1
        %s627 = scalar_lea.vmem %s6, %s626
        %p628 = scmp.lt.s32.totalorder %s29, 1
        %s629 = scalar_select %p628, %s29, 1
        %s630 = scalar_lea.vmem %s7, %s629
        // Predicated region
        $region41: #{tpu_custom_call.1} parent=27 // pred_check
          %p631 = pneg %p111
        $region42: #{tpu_custom_call.1} parent=27 // pred_check_branch
          %633 = sbr.rel (%p631) target = $region44
        $region43: #{tpu_custom_call.1} parent=27 // pred_region
          _
        $region44: #{tpu_custom_call.1} parent=27 // pred_fallthru
          _
        // Predicated region
        $region45: #{tpu_custom_call.1} parent=27 // pred_check
          %p634 = pneg %p137
        $region46: #{tpu_custom_call.1} parent=27 // pred_check_branch
          %636 = sbr.rel (%p634) target = $region48
        $region47: #{tpu_custom_call.1} parent=27 // pred_region
          _
        $region48: #{tpu_custom_call.1} parent=27 // pred_fallthru
          _
        // Predicated region
        $region49: #{tpu_custom_call.1} parent=27 // pred_check
          %p637 = pneg %p163
        $region50: #{tpu_custom_call.1} parent=27 // pred_check_branch
          %639 = sbr.rel (%p637) target = $region52
        $region51: #{tpu_custom_call.1} parent=27 // pred_region
          _
        $region52: #{tpu_custom_call.1} parent=27 // pred_fallthru
          _
        // Predicated region
        $region53: #{tpu_custom_call.1} parent=27 // pred_check
          %p640 = pneg %p189
        $region54: #{tpu_custom_call.1} parent=27 // pred_check_branch
          %642 = sbr.rel (%p640) target = $region56
        $region55: #{tpu_custom_call.1} parent=27 // pred_region
          _
        $region56: #{tpu_custom_call.1} parent=27 // pred_fallthru
          _
        // Predicated region
        $region57: #{tpu_custom_call.1} parent=27 // pred_check
          %p643 = pneg %p215
        $region58: #{tpu_custom_call.1} parent=27 // pred_check_branch
          %645 = sbr.rel (%p643) target = $region60
        $region59: #{tpu_custom_call.1} parent=27 // pred_region
          _
        $region60: #{tpu_custom_call.1} parent=27 // pred_fallthru
          _
        // Predicated region
        $region61: #{tpu_custom_call.1} parent=27 // pred_check
          %p646 = pneg %p241
        $region62: #{tpu_custom_call.1} parent=27 // pred_check_branch
          %648 = sbr.rel (%p646) target = $region64
        $region63: #{tpu_custom_call.1} parent=27 // pred_region
          _
        $region64: #{tpu_custom_call.1} parent=27 // pred_fallthru
          _
      $region28: #{tpu_custom_call.1} parent=5 // pred_fallthru
        _
      %p649 = scmp.le.s32.totalorder 2, %s20
      // Predicated region
      $region65: #{tpu_custom_call.1} parent=5 // pred_check
        %p650 = pneg %p649
      $region66: #{tpu_custom_call.1} parent=5 // pred_check_branch
        %652 = sbr.rel (%p650) target = $region68
      $region67: #{tpu_custom_call.1} parent=5 // pred_region
        %s653 = ssub.s32 %s20, 2
        // Predicated region
        $region69: #{tpu_custom_call.1} parent=67 // pred_check
          %p654 = pneg %p117
        $region70: #{tpu_custom_call.1} parent=67 // pred_check_branch
          %656 = sbr.rel (%p654) target = $region72
        $region71: #{tpu_custom_call.1} parent=67 // pred_region
          %p657 = scmp.lt.s32.totalorder %s31, 1
          %s658 = scalar_select %p657, %s31, 1
          %s659 = smul.addr %s658, 4
          %s660 = scalar_lea.vmem %s2, %s659
        $region72: #{tpu_custom_call.1} parent=67 // pred_fallthru
          _
        // Predicated region
        $region73: #{tpu_custom_call.1} parent=67 // pred_check
          %p661 = pneg %p143
        $region74: #{tpu_custom_call.1} parent=67 // pred_check_branch
          %663 = sbr.rel (%p661) target = $region76
        $region75: #{tpu_custom_call.1} parent=67 // pred_region
          %p664 = scmp.lt.s32.totalorder %s31, 1
          %s665 = scalar_select %p664, %s31, 1
          %s666 = smul.addr %s665, 4
          %s667 = scalar_lea.vmem %s3, %s666
        $region76: #{tpu_custom_call.1} parent=67 // pred_fallthru
          _
        // Predicated region
        $region77: #{tpu_custom_call.1} parent=67 // pred_check
          %p668 = pneg %p169
        $region78: #{tpu_custom_call.1} parent=67 // pred_check_branch
          %670 = sbr.rel (%p668) target = $region80
        $region79: #{tpu_custom_call.1} parent=67 // pred_region
          %p671 = scmp.lt.s32.totalorder %s31, 1
          %s672 = scalar_select %p671, %s31, 1
          %s673 = smul.addr %s672, 4
          %s674 = scalar_lea.vmem %s4, %s673
        $region80: #{tpu_custom_call.1} parent=67 // pred_fallthru
          _
        // Predicated region
        $region81: #{tpu_custom_call.1} parent=67 // pred_check
          %p675 = pneg %p195
        $region82: #{tpu_custom_call.1} parent=67 // pred_check_branch
          %677 = sbr.rel (%p675) target = $region84
        $region83: #{tpu_custom_call.1} parent=67 // pred_region
          %p678 = scmp.lt.s32.totalorder %s31, 1
          %s679 = scalar_select %p678, %s31, 1
          %s680 = scalar_lea.vmem %s5, %s679
        $region84: #{tpu_custom_call.1} parent=67 // pred_fallthru
          _
        // Predicated region
        $region85: #{tpu_custom_call.1} parent=67 // pred_check
          %p681 = pneg %p221
        $region86: #{tpu_custom_call.1} parent=67 // pred_check_branch
          %683 = sbr.rel (%p681) target = $region88
        $region87: #{tpu_custom_call.1} parent=67 // pred_region
          %p684 = scmp.lt.s32.totalorder %s31, 1
          %s685 = scalar_select %p684, %s31, 1
          %s686 = scalar_lea.vmem %s6, %s685
        $region88: #{tpu_custom_call.1} parent=67 // pred_fallthru
          _
        // Predicated region
        $region89: #{tpu_custom_call.1} parent=67 // pred_check
          %p687 = pneg %p247
        $region90: #{tpu_custom_call.1} parent=67 // pred_check_branch
          %689 = sbr.rel (%p687) target = $region92
        $region91: #{tpu_custom_call.1} parent=67 // pred_region
          %p690 = scmp.lt.s32.totalorder %s31, 1
          %s691 = scalar_select %p690, %s31, 1
          %s692 = scalar_lea.vmem %s7, %s691
        $region92: #{tpu_custom_call.1} parent=67 // pred_fallthru
          _
      $region68: #{tpu_custom_call.1} parent=5 // pred_fallthru
        _
    $region6: #{tpu_custom_call.1} parent=1 // loop_footer
      %s24 = sadd.s32 1, %s20
    $region7: #{tpu_custom_call.1} parent=1 // loop_footer_branch
      %19 = sbr.rel target = $region3
    $region8: #{tpu_custom_call.1} parent=1 // loop_exit
      _
    %693 = vsyncpa [#allocation3], 1
    %s694 = scalar_lea.sflag [#allocation3], 1
    %695 = vsyncpa %s694, 1
    %696 = vsyncpa [#allocation5], 1
    %s697 = scalar_lea.sflag [#allocation5], 1
    %698 = vsyncpa %s697, 1

</llo_original>
